<compile_context>
chip_gen: v7x
topology: tpu7x:2x2x1
jax: 0.10.0
libtpu: 0.0.40
codegen_flags: <defaults>
</compile_context>

<pallas_src>
import functools

import jax
import jax.numpy as jnp
from jax.experimental import pallas as pl
from jax.experimental.pallas import tpu as pltpu

EPS = 1e-5  # nn.InstanceNorm2d default eps


# --------------------------------------------------------------------------- #
# Kernels
# --------------------------------------------------------------------------- #
def adain_kernel(p_ref, x_ref, o_ref, *, hw):
    """Fused instance-norm + affine over the full spatial row.

    p_ref : (TR, 2)  f32, col 0 = (1 + weight), col 1 = bias
    x_ref : (TR, HW) native dtype
    o_ref : (TR, HW) native dtype
    """
    x = x_ref[...]
    inv_hw = 1.0 / hw
    # f32 accumulation directly on the native-dtype block (no extra x_f32 temp).
    mean = jnp.sum(x, axis=-1, keepdims=True, dtype=jnp.float32) * inv_hw
    d = x.astype(jnp.float32) - mean                       # single f32 temp, reused
    var = jnp.sum(d * d, axis=-1, keepdims=True) * inv_hw
    scale = p_ref[:, 0:1] * jax.lax.rsqrt(var + EPS)        # EUP rsqrt
    o_ref[...] = (d * scale + p_ref[:, 1:2]).astype(o_ref.dtype)


def adain_stats_kernel(x_ref, stats_ref, sum_acc, ssq_acc, *, hw, thw):
    """Fallback pass 1: accumulate per-row sum / sumsq over HW chunks."""
    j = pl.program_id(1)

    @pl.when(j == 0)
    def _():
        sum_acc[...] = jnp.zeros_like(sum_acc)
        ssq_acc[...] = jnp.zeros_like(ssq_acc)

    x = x_ref[...].astype(jnp.float32)                      # (TR, THW)
    col = j * thw + jax.lax.broadcasted_iota(jnp.int32, x.shape, 1)
    x = jnp.where(col < hw, x, 0.0)                         # mask tail columns
    sum_acc[...] += jnp.sum(x, axis=-1, keepdims=True)
    ssq_acc[...] += jnp.sum(x * x, axis=-1, keepdims=True)

    @pl.when(j == pl.num_programs(1) - 1)
    def _():
        inv_hw = 1.0 / hw
        mean = sum_acc[...] * inv_hw
        var = ssq_acc[...] * inv_hw - mean * mean
        inv_std = jax.lax.rsqrt(jnp.maximum(var, 0.0) + EPS)
        stats_ref[...] = jnp.concatenate([mean, inv_std], axis=-1)


def adain_apply_kernel(p_ref, stats_ref, x_ref, o_ref):
    """Fallback pass 2: streaming normalize + affine on HW chunks."""
    x = x_ref[...].astype(jnp.float32)
    mean = stats_ref[:, 0:1]
    inv_std = stats_ref[:, 1:2]
    scale = p_ref[:, 0:1] * inv_std
    o_ref[...] = ((x - mean) * scale + p_ref[:, 1:2]).astype(o_ref.dtype)


# --------------------------------------------------------------------------- #
# Tiling / VMEM policy
# --------------------------------------------------------------------------- #
def _round_up(x, m):
    return ((x + m - 1) // m) * m


def _vmem_capacity_bytes():
    try:
        cap = int(getattr(pltpu.get_tpu_info(), "vmem_capacity_bytes", 0))
        if cap > 0:
            return cap
    except Exception:
        pass
    return 64 * 1024 * 1024  # conservative (v7x)


def _plan_tiles(r, hw, itemsize, target_bytes, pack):
    """Return (row_tile, hw_tile).  hw_tile is None on the fast single-pass path."""
    row_bytes = hw * itemsize
    min_rows = min(pack, r)
    if min_rows * row_bytes <= target_bytes:
        rows_fit = target_bytes // row_bytes
        if rows_fit >= r:
            tr = r
            if r > pack:
                # split rows so v7x's two TensorCores both get parallel work
                tr = min(r, _round_up(-(-r // 2), pack))
        else:
            tr = max(pack, (rows_fit // pack) * pack)
        return tr, None
    # Spatial (HW) tiling fallback for very large images.
    tr = min_rows
    thw = max(128, (target_bytes // max(1, tr * itemsize)) // 128 * 128)
    thw = min(thw, _round_up(hw, 128))
    return tr, thw


# --------------------------------------------------------------------------- #
# Wrapper
# --------------------------------------------------------------------------- #
def adaptive_instance_norm(x, s, fc_w, fc_b):
    """x: (N, C, H, W), s: (N, S), fc_w: (2C, S) (torch Linear layout), fc_b: (2C,)."""
    N, C, H, W = x.shape
    HW = H * W
    R = N * C
    itemsize = x.dtype.itemsize

    # ---- style projection hoisted out of the kernel (tiny XLA matmul) ----
    h = (s.astype(jnp.float32) @ fc_w.astype(jnp.float32).T
         + fc_b.astype(jnp.float32))                                   # (N, 2C)
    params = jnp.stack([1.0 + h[:, :C], h[:, C:]], axis=-1).reshape(R, 2)  # (R, 2) f32

    # ---- flatten (N, C) into a dense row axis; spatial axis stays full ----
    x2 = x.reshape(R, HW)

    # ---- generation-aware VMEM budget ----
    cap = _vmem_capacity_bytes()
    target_bytes = (8 << 20) if cap >= (100 << 20) else (4 << 20)
    vmem_limit = max(32 << 20, min(96 << 20, int(0.75 * cap)))

    pack = max(8, 32 // itemsize)          # sublane pack: 8 f32 / 16 bf16 / 32 int8
    tr, thw = _plan_tiles(R, HW, itemsize, target_bytes, pack)

    if thw is None:
        # -------- single-pass streaming kernel (the common case) --------
        grid = (pl.cdiv(R, tr),)
        out2 = pl.pallas_call(
            functools.partial(adain_kernel, hw=HW),
            out_shape=jax.ShapeDtypeStruct((R, HW), x.dtype),
            grid_spec=pltpu.PrefetchScalarGridSpec(
                num_scalar_prefetch=0,
                grid=grid,
                in_specs=[
                    pl.BlockSpec((tr, 2), lambda i: (i, 0)),    # packed params
                    pl.BlockSpec((tr, HW), lambda i: (i, 0)),   # x (full HW, no pad)
                ],
                out_specs=pl.BlockSpec((tr, HW), lambda i: (i, 0)),
            ),
            compiler_params=pltpu.CompilerParams(
                dimension_semantics=("parallel",),
                vmem_limit_bytes=vmem_limit,
            ),
        )(params, x2)
    else:
        # -------- two-pass spatial-tiled fallback for very large H*W --------
        grid_r = pl.cdiv(R, tr)
        n_hw = pl.cdiv(HW, thw)

        stats = pl.pallas_call(
            functools.partial(adain_stats_kernel, hw=HW, thw=thw),
            out_shape=jax.ShapeDtypeStruct((R, 2), jnp.float32),
            grid_spec=pltpu.PrefetchScalarGridSpec(
                num_scalar_prefetch=0,
                grid=(grid_r, n_hw),
                in_specs=[pl.BlockSpec((tr, thw), lambda i, j: (i, j))],
                out_specs=pl.BlockSpec((tr, 2), lambda i, j: (i, 0)),
                scratch_shapes=[pltpu.VMEM((tr, 1), jnp.float32),
                                pltpu.VMEM((tr, 1), jnp.float32)],
            ),
            compiler_params=pltpu.CompilerParams(
                dimension_semantics=("parallel", "arbitrary"),
                vmem_limit_bytes=vmem_limit,
            ),
        )(x2)

        out2 = pl.pallas_call(
            adain_apply_kernel,
            out_shape=jax.ShapeDtypeStruct((R, HW), x.dtype),
            grid_spec=pltpu.PrefetchScalarGridSpec(
                num_scalar_prefetch=0,
                grid=(grid_r, n_hw),
                in_specs=[
                    pl.BlockSpec((tr, 2), lambda i, j: (i, 0)),     # params
                    pl.BlockSpec((tr, 2), lambda i, j: (i, 0)),     # stats
                    pl.BlockSpec((tr, thw), lambda i, j: (i, j)),   # x chunk
                ],
                out_specs=pl.BlockSpec((tr, thw), lambda i, j: (i, j)),
            ),
            compiler_params=pltpu.CompilerParams(
                dimension_semantics=("parallel", "parallel"),
                vmem_limit_bytes=vmem_limit,
            ),
        )(params, stats, x2)

    return out2.reshape(N, C, H, W)


# --------------------------------------------------------------------------- #
# Plain-JAX reference (mirrors the PyTorch module)
# --------------------------------------------------------------------------- #
def adain_reference(x, s, fc_w, fc_b):
    N, C, H, W = x.shape
    h = s @ fc_w.T + fc_b                                  # (N, 2C)
    weight = h[:, :C].reshape(N, C, 1, 1)
    bias = h[:, C:].reshape(N, C, 1, 1)
    mean = jnp.mean(x, axis=(2, 3), keepdims=True)
    var = jnp.mean((x - mean) ** 2, axis=(2, 3), keepdims=True)
    xn = (x - mean) * jax.lax.rsqrt(var + EPS)
    return (1.0 + weight) * xn + bias


if __name__ == "__main__":
    # Small deterministic shapes: N=2, C=4, H=W=16, style_dim=8
    N, C, H, W, S = 2, 4, 16, 16, 8

    key = jax.random.PRNGKey(0)
    kx, ks, kw, kb = jax.random.split(key, 4)

    x = jax.random.normal(kx, (N, C, H, W), dtype=jnp.float32)
    s = jax.random.normal(ks, (N, S), dtype=jnp.float32)

    # Deterministic Linear(style_dim, 2C) params (torch layout: W (2C,S), b (2C,))
    bound = 1.0 / jnp.sqrt(S)
    fc_w = jax.random.uniform(kw, (2 * C, S), minval=-bound, maxval=bound,
                              dtype=jnp.float32)
    fc_b = jax.random.uniform(kb, (2 * C,), minval=-bound, maxval=bound,
                              dtype=jnp.float32)

    out = adaptive_instance_norm(x, s, fc_w, fc_b)
    out = jax.block_until_ready(out)

    ref = adain_reference(x, s, fc_w, fc_b)
    assert out.shape == (N, C, H, W)
    assert jnp.allclose(out, ref, atol=1e-4, rtol=1e-4), "mismatch vs reference"

    print("KERNEL_OK")
</pallas_src>

<mosaic_0001>
module attributes {stable_mosaic.version = 11 : i64} {
  func.func @adain_kernel(%arg0: i32, %arg1: memref<8x2xf32, #tpu.memory_space<vmem>>, %arg2: memref<8x256xf32, #tpu.memory_space<vmem>>, %arg3: memref<8x256xf32, #tpu.memory_space<vmem>>) attributes {dimension_semantics = [#tpu.dimension_semantics<parallel>], iteration_bounds = array<i64: 1>, scalar_prefetch = 0 : i64, scratch_operands = 0 : i64, tpu.core_type = #tpu.core_type<tc>, window_params = [{transform_indices = @transform_0, window_bounds = array<i64: 8, 2>}, {transform_indices = @transform_1, window_bounds = array<i64: 8, 256>}, {transform_indices = @transform_2, window_bounds = array<i64: 8, 256>}]} {
    %c0 = arith.constant 0 : index
    %c0_0 = arith.constant 0 : index
    %0 = vector.load %arg2[%c0, %c0_0] : memref<8x256xf32, #tpu.memory_space<vmem>>, vector<8x256xf32>
    %cst = arith.constant dense<0.000000e+00> : vector<8xf32>
    %1 = vector.multi_reduction <add>, %0, %cst [1] : vector<8x256xf32> to vector<8xf32>
    %2 = vector.shape_cast %1 : vector<8xf32> to vector<8x1xf32>
    %cst_1 = arith.constant 3.906250e-03 : f32
    %3 = vector.broadcast %cst_1 : f32 to vector<8x1xf32>
    %4 = arith.mulf %2, %3 : vector<8x1xf32>
    %5 = vector.broadcast %4 : vector<8x1xf32> to vector<8x256xf32>
    %6 = arith.subf %0, %5 : vector<8x256xf32>
    %7 = arith.mulf %6, %6 : vector<8x256xf32>
    %cst_2 = arith.constant dense<0.000000e+00> : vector<8xf32>
    %8 = vector.multi_reduction <add>, %7, %cst_2 [1] : vector<8x256xf32> to vector<8xf32>
    %9 = vector.shape_cast %8 : vector<8xf32> to vector<8x1xf32>
    %cst_3 = arith.constant 3.906250e-03 : f32
    %10 = vector.broadcast %cst_3 : f32 to vector<8x1xf32>
    %11 = arith.mulf %9, %10 : vector<8x1xf32>
    %c0_4 = arith.constant 0 : index
    %c0_5 = arith.constant 0 : index
    %12 = vector.load %arg1[%c0_4, %c0_5] : memref<8x2xf32, #tpu.memory_space<vmem>>, vector<8x1xf32>
    %cst_6 = arith.constant 9.99999974E-6 : f32
    %13 = vector.broadcast %cst_6 : f32 to vector<8x1xf32>
    %14 = arith.addf %11, %13 : vector<8x1xf32>
    %15 = math.rsqrt %14 : vector<8x1xf32>
    %16 = arith.mulf %12, %15 : vector<8x1xf32>
    %17 = vector.broadcast %16 : vector<8x1xf32> to vector<8x256xf32>
    %18 = arith.mulf %6, %17 : vector<8x256xf32>
    %c0_7 = arith.constant 0 : index
    %c1 = arith.constant 1 : index
    %19 = vector.load %arg1[%c0_7, %c1] : memref<8x2xf32, #tpu.memory_space<vmem>>, vector<8x1xf32>
    %20 = vector.broadcast %19 : vector<8x1xf32> to vector<8x256xf32>
    %21 = arith.addf %18, %20 : vector<8x256xf32>
    %c0_8 = arith.constant 0 : index
    %c0_9 = arith.constant 0 : index
    %22 = vector.load %arg3[%c0_8, %c0_9] : memref<8x256xf32, #tpu.memory_space<vmem>>, vector<8x256xf32>
    tpu.vector_store %arg3[%c0_8, %c0_9], %21 {strides = array<i32>} : memref<8x256xf32, #tpu.memory_space<vmem>>, vector<8x256xf32>,
    return
  }
  func.func @transform_0(%arg0: i32) -> (i32, i32) {
    %c0_i32 = arith.constant 0 : i32
    %c0_i32_0 = arith.constant 0 : i32
    return %arg0, %c0_i32 : i32, i32
  }
  func.func @transform_1(%arg0: i32) -> (i32, i32) {
    %c0_i32 = arith.constant 0 : i32
    %c0_i32_0 = arith.constant 0 : i32
    return %arg0, %c0_i32 : i32, i32
  }
  func.func @transform_2(%arg0: i32) -> (i32, i32) {
    %c0_i32 = arith.constant 0 : i32
    %c0_i32_0 = arith.constant 0 : i32
    return %arg0, %c0_i32 : i32, i32
  }
}

</mosaic_0001>

<llo_original>
// kernel: tpu_custom_call.1
$region0: #{tpu_custom_call.1}
  #allocation0 [shape = 'u32[]', space=smem, size = 0x4, offset = 0x4, fixed_abs, tag = 'smem constant byte address 0x4 - core index']
  #allocation1 [shape = 'u32[144,128]{1,0:T(1,128)}', space=vmem, size = 0x12000, scoped, tag = 'internal scratch']
  %s0 = inlined_call_operand.vmem [shape: f32[8,2], index: 0, kind: input, shape index: {}]
  %s1 = inlined_call_operand.hbm [shape: f32[8,256], index: 1, kind: input, shape index: {}]
  %s2 = inlined_call_operand.hbm [shape: f32[8,256], index: 2, kind: output, shape index: {}]
  %s3 = sld [smem:[#allocation0]]
  $region22: #{tpu_custom_call.1} parent=0
    _
  %s5 = ssub.s32 1, %s3
  %s6 = scalar_select 0, %s5, %s3
  $region1: #{tpu_custom_call.1} parent=0
    #allocation2 [shape = 'u8[8192]{0}', space=vmem, size = 0x2000, scoped, tag = 'input window, operand 1, single buffered']
    #allocation3 [shape = 's32[1]{0}', space=sflag, size = 0x4, scoped, tag = 'scoped memory for tpu_custom_call.1']
    #allocation4 [shape = 's32[1]{0}', space=sflag, size = 0x4, scoped, tag = 'scoped memory for tpu_custom_call.1']
    #allocation5 [shape = 'u8[8192]{0}', space=vmem, size = 0x2000, scoped, tag = 'output window, operand 0, single buffered']
    %7 = vsyncpa [#allocation3], 0
    %8 = vsyncpa [#allocation4], 0
    // Predicated region
    $region2: #{tpu_custom_call.1} parent=1 // pred_check
      _
    $region3: #{tpu_custom_call.1} parent=1 // pred_check_branch
      %10 = sbr.rel (0) target = $region5
    $region4: #{tpu_custom_call.1} parent=1 // pred_region
      _
    $region5: #{tpu_custom_call.1} parent=1 // pred_fallthru
      _
    // Predicated region
    $region6: #{tpu_custom_call.1} parent=1 // pred_check
      _
    $region7: #{tpu_custom_call.1} parent=1 // pred_check_branch
      %12 = sbr.rel (0) target = $region9
    $region8: #{tpu_custom_call.1} parent=1 // pred_region
      %s14 = ssub.s32 256, 256
      %15 = vsyncadd [#allocation3], %s14
      %s17 = sshll.u32 [#allocation2], 4
      %s18 = int_to_ptr.vmem [resolvable:$true] %s17
      %20 = dma.hbm_to_vmem [thread:$0]  %s1, 256, %s18, [#allocation3]
    $region9: #{tpu_custom_call.1} parent=1 // pred_fallthru
      _
    // Predicated region
    $region10: #{tpu_custom_call.1} parent=1 // pred_check
      _
    $region11: #{tpu_custom_call.1} parent=1 // pred_check_branch
      %22 = sbr.rel (0) target = $region13
    $region12: #{tpu_custom_call.1} parent=1 // pred_region
      %23 = dma.done [#allocation3], 256
    $region13: #{tpu_custom_call.1} parent=1 // pred_fallthru
      _
    %v24 = vld [vmem:[#allocation2] sm:$0xff]
    %v25 = vld [vmem:[#allocation2 + $0x8] sm:$0xff]
    %v26 = vadd.f32 %v24, %v25
    %27 = vadd.xlane.f32.xlu0 %v26
    %v28 = vpop.xlane.xlu0 %27
    %v29 = vmul.f32 %v28, 0.00390625
    %v30 = vsub.f32 %v24, %v29
    %v31 = vsub.f32 %v25, %v29
    %v32 = vmul.f32 %v30, %v30
    %v33 = vmul.f32 %v31, %v31
    %v34 = vadd.f32 %v32, %v33
    %35 = vadd.xlane.f32.xlu0 %v34
    %v36 = vpop.xlane.xlu0 %35
    %v37 = vmul.f32 %v36, 0.00390625
    %v38 = vld [vmem:[%s0] sm:$0xff]
    %v39 = vadd.f32 %v37, 1e-05
    %v40 = vrsqrt.pop %v39
    %v41 = vmul.f32 %v38, %v40
    %43 = vset.pattern.permute.xlu0 0
    %44 = vperm.xlu0 %43, %v41
    %v45 = vpop.permute.xlu0 %44
    %v47 = vmul.f32 %v30, %v45
    %v48 = vmul.f32 %v31, %v45
    %50 = vset.pattern.permute.xlu0 1
    %51 = vperm.xlu0 %50, %v38
    %v52 = vpop.permute.xlu0 %51
    %v54 = vadd.f32 %v47, %v52
    %v55 = vadd.f32 %v48, %v52
    %56 = vst [vmem:[#allocation5] sm:$0xff] %v54
    %57 = vst [vmem:[#allocation5 + $0x8] sm:$0xff] %v55
    // Predicated region
    $region14: #{tpu_custom_call.1} parent=1 // pred_check
      _
    $region15: #{tpu_custom_call.1} parent=1 // pred_check_branch
      %59 = sbr.rel (0) target = $region17
    $region16: #{tpu_custom_call.1} parent=1 // pred_region
      %s61 = ssub.s32 256, 256
      %62 = vsyncadd [#allocation4], %s61
      %s64 = sshll.u32 [#allocation5], 4
      %s65 = int_to_ptr.vmem [resolvable:$true] %s64
      %67 = dma.vmem_to_hbm [thread:$0]  %s65, 256, %s2, [#allocation4]
    $region17: #{tpu_custom_call.1} parent=1 // pred_fallthru
      _
    // Predicated region
    $region18: #{tpu_custom_call.1} parent=1 // pred_check
      _
    $region19: #{tpu_custom_call.1} parent=1 // pred_check_branch
      %69 = sbr.rel (0) target = $region21
    $region20: #{tpu_custom_call.1} parent=1 // pred_region
      %70 = dma.done [#allocation4], 256
    $region21: #{tpu_custom_call.1} parent=1 // pred_fallthru
      _
    %71 = vsyncpa [#allocation3], 1
    %72 = vsyncpa [#allocation4], 1

</llo_original>
